<compile_context>
chip_gen: v7x
topology: tpu7x:2x2x1
jax: 0.10.0
libtpu: 0.0.40
codegen_flags: <defaults>
</compile_context>

<pallas_src>
import functools

import jax
import jax.numpy as jnp
from jax.experimental import pallas as pl
from jax.experimental.pallas import tpu as pltpu


_VMEM_LIMIT_BYTES = 32 * 1024 * 1024      # safe scoped limit on v5e/v6e/v7x
_SEQ_TILE_BUDGET_BYTES = 4 * 1024 * 1024  # per seq block (x2 for double buffering)


def _choose_tiles(B, N, D, itemsize, budget=_SEQ_TILE_BUDGET_BYTES):
    """Pick (tb, td, tn) tile sizes honoring the (8, 128) block constraints."""
    # Batch tile: sublane dim of the mask/output blocks -> multiple of 8 or == B.
    tb = 8 if B > 8 else B
    # Feature tile (lane dim of seq/out): multiple of 128, or full D otherwise.
    td = D
    if D % 128 == 0:
        while (td > 512 and td % 256 == 0
               and tb * N * td * itemsize > budget):
            td //= 2
    # Node tile: full N when the slab fits; otherwise a multiple of 128, which
    # satisfies both the seq sublane constraint and the msk lane constraint.
    tn = N
    if tb * N * td * itemsize > budget and N > 128:
        fit = budget // (tb * td * itemsize)
        tn = min(N, max(128, (fit // 128) * 128))
    return tb, td, tn


def _masked_readout_kernel(inv_ref, seq_ref, msk_ref, out_ref, acc_ref,
                           *, n_nodes, tn, mask_tail):
    # inv_ref: (1, 1) f32 in SMEM  -- 1 / sum(msk), hoisted out of the kernel.
    # seq_ref: (tb, tn, td) VMEM block; msk_ref: (tb, tn) VMEM block.
    # out_ref: (tb, td) lane-dense output block; acc_ref: (tb, td) f32 scratch.
    ni = pl.program_id(2)

    @pl.when(ni == 0)
    def _init():
        acc_ref[...] = jnp.zeros_like(acc_ref)

    seq = seq_ref[...].astype(jnp.float32)
    msk = msk_ref[...].astype(jnp.float32)
    prod = seq * msk[:, :, None]
    if mask_tail:
        node_idx = ni * tn + jax.lax.broadcasted_iota(jnp.int32, msk.shape, 1)
        prod = jnp.where((node_idx < n_nodes)[:, :, None], prod, 0.0)
    acc_ref[...] += jnp.sum(prod, axis=1)                   # (tb, td) f32

    @pl.when(ni == pl.num_programs(2) - 1)
    def _finalize():
        out_ref[...] = (acc_ref[...] * inv_ref[0, 0]).astype(out_ref.dtype)


def _mean_readout_kernel(seq_ref, out_ref, acc_ref, *, n_nodes, tn, mask_tail):
    # seq_ref: (tb, tn, td); out_ref: (tb, td); acc_ref: (tb, td) f32 scratch.
    ni = pl.program_id(2)

    @pl.when(ni == 0)
    def _init():
        acc_ref[...] = jnp.zeros_like(acc_ref)

    seq = seq_ref[...].astype(jnp.float32)
    if mask_tail:
        node_idx = ni * tn + jax.lax.broadcasted_iota(jnp.int32, seq.shape[:2], 1)
        seq = jnp.where((node_idx < n_nodes)[:, :, None], seq, 0.0)
    acc_ref[...] += jnp.sum(seq, axis=1)                    # (tb, td) f32

    @pl.when(ni == pl.num_programs(2) - 1)
    def _finalize():
        out_ref[...] = (acc_ref[...] * (1.0 / n_nodes)).astype(out_ref.dtype)


def avg_readout(seq, msk=None, *, _tiles=None):
    """Pallas implementation of AvgReadout.forward(seq, msk).

    seq: (B, N, D); msk: (B, N) or None.  Returns (B, D).
    Note: as in the PyTorch reference, the masked denominator is the sum over
    the ENTIRE mask (all batches), and an all-zero mask yields Inf/NaN.
    """
    B, N, D = seq.shape
    if _tiles is None:
        tb, td, tn = _choose_tiles(B, N, D, seq.dtype.itemsize)
    else:
        tb, td, tn = _tiles

    mask_tail = (N % tn) != 0
    grid = (pl.cdiv(B, tb), pl.cdiv(D, td), pl.cdiv(N, tn))

    out_shape = jax.ShapeDtypeStruct((B, D), seq.dtype)
    seq_spec = pl.BlockSpec((tb, tn, td), lambda bi, di, ni: (bi, ni, di))
    out_spec = pl.BlockSpec((tb, td), lambda bi, di, ni: (bi, di))
    scratch = [pltpu.VMEM((tb, td), jnp.float32)]
    cparams = pltpu.CompilerParams(
        dimension_semantics=("parallel", "parallel", "arbitrary"),
        vmem_limit_bytes=_VMEM_LIMIT_BYTES,
    )

    if msk is None:
        kernel = functools.partial(
            _mean_readout_kernel, n_nodes=N, tn=tn, mask_tail=mask_tail)
        return pl.pallas_call(
            kernel,
            out_shape=out_shape,
            grid=grid,
            in_specs=[seq_spec],
            out_specs=out_spec,
            scratch_shapes=scratch,
            compiler_params=cparams,
        )(seq)

    msk = msk.astype(jnp.float32)
    inv_denom = (1.0 / jnp.sum(msk)).reshape(1, 1)          # hoisted global denom
    msk_spec = pl.BlockSpec((tb, tn), lambda bi, di, ni: (bi, ni))
    kernel = functools.partial(
        _masked_readout_kernel, n_nodes=N, tn=tn, mask_tail=mask_tail)
    return pl.pallas_call(
        kernel,
        out_shape=out_shape,
        grid=grid,
        in_specs=[
            pl.BlockSpec(memory_space=pltpu.MemorySpace.SMEM),  # inv_denom scalar
            seq_spec,
            msk_spec,
        ],
        out_specs=out_spec,
        scratch_shapes=scratch,
        compiler_params=cparams,
    )(inv_denom, seq, msk)


if __name__ == "__main__":
    key = jax.random.PRNGKey(0)

    # ---- small shapes (single block, no node tiling) -----------------------
    B, N, D = 2, 8, 32
    k_seq, k_msk, k_seq2, k_msk2 = jax.random.split(key, 4)

    seq = jax.random.normal(k_seq, (B, N, D), dtype=jnp.float32)
    msk = (jax.random.uniform(k_msk, (B, N)) > 0.3).astype(jnp.float32)
    msk = msk.at[0, 0].set(1.0)   # guarantee non-empty mask

    out_masked = jax.block_until_ready(avg_readout(seq, msk))
    ref_masked = jnp.sum(seq * msk[:, :, None], axis=1) / jnp.sum(msk)

    out_mean = jax.block_until_ready(avg_readout(seq, None))
    ref_mean = jnp.mean(seq, axis=1)

    assert out_masked.shape == (B, D) and out_mean.shape == (B, D)
    assert jnp.allclose(out_masked, ref_masked, atol=1e-5, rtol=1e-5)
    assert jnp.allclose(out_mean, ref_mean, atol=1e-5, rtol=1e-5)

    # ---- forced node-tiled path (accumulator + ragged tail block) ----------
    B2, N2, D2 = 8, 320, 256
    seq2 = jax.random.normal(k_seq2, (B2, N2, D2), dtype=jnp.float32)
    msk2 = (jax.random.uniform(k_msk2, (B2, N2)) > 0.3).astype(jnp.float32)
    msk2 = msk2.at[0, 0].set(1.0)

    tiles = (8, 128, 128)  # tb, td, tn -> 3 node blocks, last one padded (masked)
    out_masked2 = jax.block_until_ready(avg_readout(seq2, msk2, _tiles=tiles))
    ref_masked2 = jnp.sum(seq2 * msk2[:, :, None], axis=1) / jnp.sum(msk2)

    out_mean2 = jax.block_until_ready(avg_readout(seq2, None, _tiles=tiles))
    ref_mean2 = jnp.mean(seq2, axis=1)

    assert out_masked2.shape == (B2, D2) and out_mean2.shape == (B2, D2)
    assert jnp.allclose(out_masked2, ref_masked2, atol=1e-4, rtol=1e-4)
    assert jnp.allclose(out_mean2, ref_mean2, atol=1e-4, rtol=1e-4)

    print("KERNEL_OK")
</pallas_src>

<mosaic_0001>
module attributes {stable_mosaic.version = 11 : i64} {
  func.func @_masked_readout_kernel(%arg0: i32, %arg1: i32, %arg2: i32, %arg3: memref<1x1xf32, #tpu.memory_space<smem>>, %arg4: memref<2x8x32xf32, #tpu.memory_space<vmem>>, %arg5: memref<2x8xf32, #tpu.memory_space<vmem>>, %arg6: memref<2x32xf32, #tpu.memory_space<vmem>>, %arg7: memref<2x32xf32, #tpu.memory_space<vmem>>) attributes {dimension_semantics = [#tpu.dimension_semantics<parallel>, #tpu.dimension_semantics<parallel>, #tpu.dimension_semantics<arbitrary>], iteration_bounds = array<i64: 1, 1, 1>, scalar_prefetch = 0 : i64, scratch_operands = 1 : i64, tpu.core_type = #tpu.core_type<tc>, window_params = [{transform_indices = @transform_0, window_bounds = array<i64: 1, 1>}, {transform_indices = @transform_1, window_bounds = array<i64: 2, 8, 32>}, {transform_indices = @transform_2, window_bounds = array<i64: 2, 8>}, {transform_indices = @transform_3, window_bounds = array<i64: 2, 32>}]} {
    %c0_i32 = arith.constant 0 : i32
    %0 = arith.cmpi eq, %arg2, %c0_i32 : i32
    %1 = arith.extui %0 : i1 to i32
    %c0_i32_0 = arith.constant 0 : i32
    %2 = arith.cmpi ne, %1, %c0_i32_0 : i32
    scf.if %2 {
      %cst_11 = arith.constant 0.000000e+00 : f32
      %15 = vector.broadcast %cst_11 : f32 to vector<2x32xf32>
      %c0_12 = arith.constant 0 : index
      %c0_13 = arith.constant 0 : index
      %16 = vector.load %arg7[%c0_12, %c0_13] : memref<2x32xf32, #tpu.memory_space<vmem>>, vector<2x32xf32>
      tpu.vector_store %arg7[%c0_12, %c0_13], %15 {strides = array<i32>} : memref<2x32xf32, #tpu.memory_space<vmem>>, vector<2x32xf32>,
    } else {
    }
    %c0 = arith.constant 0 : index
    %c0_1 = arith.constant 0 : index
    %c0_2 = arith.constant 0 : index
    %3 = vector.load %arg4[%c0, %c0_1, %c0_2] : memref<2x8x32xf32, #tpu.memory_space<vmem>>, vector<2x8x32xf32>
    %c0_3 = arith.constant 0 : index
    %c0_4 = arith.constant 0 : index
    %4 = vector.load %arg5[%c0_3, %c0_4] : memref<2x8xf32, #tpu.memory_space<vmem>>, vector<2x8xf32>
    %5 = vector.shape_cast %4 : vector<2x8xf32> to vector<2x8x1xf32>
    %6 = vector.broadcast %5 : vector<2x8x1xf32> to vector<2x8x32xf32>
    %7 = arith.mulf %3, %6 : vector<2x8x32xf32>
    %c0_5 = arith.constant 0 : index
    %c0_6 = arith.constant 0 : index
    %8 = vector.load %arg7[%c0_5, %c0_6] : memref<2x32xf32, #tpu.memory_space<vmem>>, vector<2x32xf32>
    %cst = arith.constant dense<0.000000e+00> : vector<2x32xf32>
    %9 = vector.multi_reduction <add>, %7, %cst [1] : vector<2x8x32xf32> to vector<2x32xf32>
    %10 = arith.addf %8, %9 : vector<2x32xf32>
    %c0_7 = arith.constant 0 : index
    %c0_8 = arith.constant 0 : index
    %11 = vector.load %arg7[%c0_7, %c0_8] : memref<2x32xf32, #tpu.memory_space<vmem>>, vector<2x32xf32>
    tpu.vector_store %arg7[%c0_7, %c0_8], %10 {strides = array<i32>} : memref<2x32xf32, #tpu.memory_space<vmem>>, vector<2x32xf32>,
    %c0_i32_9 = arith.constant 0 : i32
    %12 = arith.cmpi eq, %arg2, %c0_i32_9 : i32
    %13 = arith.extui %12 : i1 to i32
    %c0_i32_10 = arith.constant 0 : i32
    %14 = arith.cmpi ne, %13, %c0_i32_10 : i32
    scf.if %14 {
      %c0_11 = arith.constant 0 : index
      %c0_12 = arith.constant 0 : index
      %15 = vector.load %arg7[%c0_11, %c0_12] : memref<2x32xf32, #tpu.memory_space<vmem>>, vector<2x32xf32>
      %c0_13 = arith.constant 0 : index
      %c0_14 = arith.constant 0 : index
      %16 = memref.load %arg3[%c0_13, %c0_14] : memref<1x1xf32, #tpu.memory_space<smem>>
      %17 = vector.broadcast %16 : f32 to vector<2x32xf32>
      %18 = arith.mulf %15, %17 : vector<2x32xf32>
      %c0_15 = arith.constant 0 : index
      %c0_16 = arith.constant 0 : index
      %19 = vector.load %arg6[%c0_15, %c0_16] : memref<2x32xf32, #tpu.memory_space<vmem>>, vector<2x32xf32>
      tpu.vector_store %arg6[%c0_15, %c0_16], %18 {strides = array<i32>} : memref<2x32xf32, #tpu.memory_space<vmem>>, vector<2x32xf32>,
    } else {
    }
    return
  }
  func.func @transform_0(%arg0: i32, %arg1: i32, %arg2: i32) -> (i32, i32) {
    %c0_i32 = arith.constant 0 : i32
    %c0_i32_0 = arith.constant 0 : i32
    %c0_i32_1 = arith.constant 0 : i32
    return %c0_i32, %c0_i32_0 : i32, i32
  }
  func.func @transform_1(%arg0: i32, %arg1: i32, %arg2: i32) -> (i32, i32, i32) {
    %c0_i32 = arith.constant 0 : i32
    return %arg0, %arg2, %arg1 : i32, i32, i32
  }
  func.func @transform_2(%arg0: i32, %arg1: i32, %arg2: i32) -> (i32, i32) {
    %c0_i32 = arith.constant 0 : i32
    return %arg0, %arg2 : i32, i32
  }
  func.func @transform_3(%arg0: i32, %arg1: i32, %arg2: i32) -> (i32, i32) {
    %c0_i32 = arith.constant 0 : i32
    return %arg0, %arg1 : i32, i32
  }
}

</mosaic_0001>

<llo_original>
// kernel: tpu_custom_call.1
$region0: #{tpu_custom_call.1}
  #allocation0 [shape = 'u32[]', space=smem, size = 0x4, offset = 0x4, fixed_abs, tag = 'smem constant byte address 0x4 - core index']
  #allocation1 [shape = 'u32[144,128]{1,0:T(1,128)}', space=vmem, size = 0x12000, scoped, tag = 'internal scratch']
  #allocation2 [shape = 'f32[2,32]{1,0:T(2,128)}', space=vmem, size = 0x400, scoped, tag = 'scratch operand']
  #allocation3 [shape = 'f32[1,1]{1,0:T(1,128)S(6)}', space=smem, size = 0x200, scoped, tag = 'scoped memory for tpu_custom_call.1']
  %s0 = inlined_call_operand.<no memory space> [shape: f32[1,1], index: 0, kind: input, shape index: {}]
  %s1 = inlined_call_operand.hbm [shape: f32[2,8,32], index: 1, kind: input, shape index: {}]
  %s2 = inlined_call_operand.vmem [shape: f32[2,8], index: 2, kind: input, shape index: {}]
  %s3 = inlined_call_operand.hbm [shape: f32[2,32], index: 3, kind: output, shape index: {}]
  %s4 = sld [smem:[#allocation0]]
  $region34: #{tpu_custom_call.1} parent=0
    _
  %s6 = ssub.s32 1, %s4
  %s7 = scalar_select 0, %s6, %s4
  %8 = sst [smem:[#allocation3]] %s0
  $region1: #{tpu_custom_call.1} parent=0
    #allocation4 [shape = 'u8[8192]{0}', space=vmem, size = 0x2000, scoped, tag = 'input window, operand 1, single buffered']
    #allocation5 [shape = 's32[1]{0}', space=sflag, size = 0x4, scoped, tag = 'scoped memory for tpu_custom_call.1']
    #allocation6 [shape = 's32[1]{0}', space=sflag, size = 0x4, scoped, tag = 'scoped memory for tpu_custom_call.1']
    #allocation7 [shape = 'u8[1024]{0}', space=vmem, size = 0x400, scoped, tag = 'output window, operand 0, single buffered']
    %9 = vsyncpa [#allocation5], 0
    %10 = vsyncpa [#allocation6], 0
    // Predicated region
    $region2: #{tpu_custom_call.1} parent=1 // pred_check
      _
    $region3: #{tpu_custom_call.1} parent=1 // pred_check_branch
      %12 = sbr.rel (0) target = $region5
    $region4: #{tpu_custom_call.1} parent=1 // pred_region
      _
    $region5: #{tpu_custom_call.1} parent=1 // pred_fallthru
      _
    // Predicated region
    $region6: #{tpu_custom_call.1} parent=1 // pred_check
      _
    $region7: #{tpu_custom_call.1} parent=1 // pred_check_branch
      %14 = sbr.rel (0) target = $region9
    $region8: #{tpu_custom_call.1} parent=1 // pred_region
      %s16 = ssub.s32 256, 256
      %17 = vsyncadd [#allocation5], %s16
      %s18 = sshll.u32 [#allocation4], 4
      %s19 = int_to_ptr.vmem [resolvable:$true] %s18
      %24 = dma.hbm_to_vmem [thread:$0]  %s1, 256, %s19, [#allocation5], 128, 128, 8
    $region9: #{tpu_custom_call.1} parent=1 // pred_fallthru
      _
    // Predicated region
    $region10: #{tpu_custom_call.1} parent=1 // pred_check
      _
    $region11: #{tpu_custom_call.1} parent=1 // pred_check_branch
      %26 = sbr.rel (0) target = $region13
    $region12: #{tpu_custom_call.1} parent=1 // pred_region
      _
    $region13: #{tpu_custom_call.1} parent=1 // pred_fallthru
      _
    // Predicated region
    $region14: #{tpu_custom_call.1} parent=1 // pred_check
      _
    $region15: #{tpu_custom_call.1} parent=1 // pred_check_branch
      %28 = sbr.rel (0) target = $region17
    $region16: #{tpu_custom_call.1} parent=1 // pred_region
      %29 = dma.done [#allocation5], 256
    $region17: #{tpu_custom_call.1} parent=1 // pred_fallthru
      _
    %p30 = scmp.eq.s32.totalorder 0, 0
    // Predicated region
    $region18: #{tpu_custom_call.1} parent=1 // pred_check
      %p31 = pneg %p30
    $region19: #{tpu_custom_call.1} parent=1 // pred_check_branch
      %33 = sbr.rel (%p31) target = $region21
    $region20: #{tpu_custom_call.1} parent=1 // pred_region
      %vm34 = vcmask 254976
      %35 = vst.msk [vmem:[#allocation2] sm:$0x3] %vm34, 0.0
    $region21: #{tpu_custom_call.1} parent=1 // pred_fallthru
      _
    %v36 = vld [vmem:[#allocation4] sm:$0xff]
    %v37 = vld [vmem:[#allocation4 + $0x8] sm:$0xff]
    %v38 = vld [vmem:[%s2] sm:$0x3]
    %v39 = vlaneseq
    %v40 = vshrl.u32 %v39, 7
    %v41 = vsub.s32 0, %v40
    %v42 = vrot.slane %v38, %v41
    %44 = vbcast.lane.b32.xlu0 %v42, 256
    %v45 = vpop.permute.xlu0 %44
    %v46 = vlaneseq
    %v47 = vshrl.u32 %v46, 7
    %v48 = vsub.s32 1, %v47
    %v49 = vrot.slane %v38, %v48
    %51 = vbcast.lane.b32.xlu0 %v49, 256
    %v52 = vpop.permute.xlu0 %51
    %v53 = vmul.f32 %v36, %v45
    %v54 = vmul.f32 %v37, %v52
    %v55 = vld [vmem:[#allocation2] sm:$0x3]
    %vm56 = vcmask 261120
    %v57 = vsel %vm56, %v53, 0.0
    %v58 = vrot.slane %v57, 4
    %v59 = vadd.f32 %v57, %v58
    %v60 = vrot.slane %v59, 2
    %v61 = vadd.f32 %v59, %v60
    %v62 = vrot.slane %v61, 1
    %v63 = vadd.f32 %v61, %v62
    %v64 = vsel %vm56, %v54, 0.0
    %v65 = vrot.slane %v64, 4
    %v66 = vadd.f32 %v64, %v65
    %v67 = vrot.slane %v66, 2
    %v68 = vadd.f32 %v66, %v67
    %v69 = vrot.slane %v68, 1
    %v70 = vadd.f32 %v68, %v69
    %vm73 = vcmask 1041409
    %v74 = vsel %vm73, %v70, %v63
    %v76 = vadd.f32 %v55, %v74
    %vm77 = vcmask 254976
    %78 = vst.msk [vmem:[#allocation2] sm:$0x3] %vm77, %v76
    // Predicated region
    $region22: #{tpu_custom_call.1} parent=1 // pred_check
      %p79 = pneg %p30
    $region23: #{tpu_custom_call.1} parent=1 // pred_check_branch
      %81 = sbr.rel (%p79) target = $region25
    $region24: #{tpu_custom_call.1} parent=1 // pred_region
      %v82 = vld [vmem:[#allocation2] sm:$0x3]
      %s83 = sld [smem:[#allocation3]]
      %v84 = vstv %s83
      %v85 = vmul.f32 %v82, %v84
      %86 = vst.msk [vmem:[#allocation7] sm:$0x3] %vm77, %v85
    $region25: #{tpu_custom_call.1} parent=1 // pred_fallthru
      _
    // Predicated region
    $region26: #{tpu_custom_call.1} parent=1 // pred_check
      _
    $region27: #{tpu_custom_call.1} parent=1 // pred_check_branch
      %88 = sbr.rel (0) target = $region29
    $region28: #{tpu_custom_call.1} parent=1 // pred_region
      %s90 = ssub.s32 32, 32
      %91 = vsyncadd [#allocation6], %s90
      %s93 = sshll.u32 [#allocation7], 4
      %s94 = int_to_ptr.vmem [resolvable:$true] %s93
      %96 = dma.vmem_to_hbm [thread:$0]  %s94, 32, %s3, [#allocation6]
    $region29: #{tpu_custom_call.1} parent=1 // pred_fallthru
      _
    // Predicated region
    $region30: #{tpu_custom_call.1} parent=1 // pred_check
      _
    $region31: #{tpu_custom_call.1} parent=1 // pred_check_branch
      %98 = sbr.rel (0) target = $region33
    $region32: #{tpu_custom_call.1} parent=1 // pred_region
      %99 = dma.done [#allocation6], 32
    $region33: #{tpu_custom_call.1} parent=1 // pred_fallthru
      _
    %100 = vsyncpa [#allocation5], 1
    %101 = vsyncpa [#allocation6], 1

</llo_original>
